<compile_context>
chip_gen: v5e
topology: v5e:2x2
jax: 0.10.0
libtpu: 0.0.40
codegen_flags: <defaults>
</compile_context>

<pallas_src>
import functools

import jax
import jax.numpy as jnp
from jax.experimental import pallas as pl
from jax.experimental.pallas import tpu as pltpu


def _sigmoid_1push(x):
    """sigmoid(x) = 0.5*(1 + tanh(0.5*x)) -- one EUP transcendental instead of exp+recip."""
    return 0.5 * (jnp.tanh(0.5 * x) + 1.0)


def _gate_proj_kernel(G3, x_ref, w6_ref, b6_ref, g_ref):
    """One time block: (TB*B, D) @ (D, 6H) fused over both directions, biases folded."""
    x = x_ref[...]                                     # (TB, B, D)
    tb, bsz, d_in = x.shape
    xf = x.reshape(tb * bsz, d_in)
    g = jnp.dot(xf, w6_ref[...], preferred_element_type=jnp.float32) + b6_ref[...]  # (TB*B, 6H)
    g_ref[0] = g[:, :G3].reshape(tb, bsz, G3).astype(g_ref.dtype)   # forward gates
    g_ref[1] = g[:, G3:].reshape(tb, bsz, G3).astype(g_ref.dtype)   # backward gates


def _recurrence_kernel(H, TB,
                       g_ref, whh_ref,
                       out_ref, hn_ref, cn_ref,
                       h_sc, c_sc):
    # Grid iterates d-outer / t-inner; h_sc/c_sc are shared across the direction axis
    # and reset at t == 0 (safe because of that ordering; under core-parallel sharding
    # each core has private scratch).
    d = pl.program_id(0)            # 0 = forward, 1 = backward
    t = pl.program_id(1)            # time-block step (backward visits blocks in reverse)

    @pl.when(t == 0)
    def _():
        h_sc[...] = jnp.zeros_like(h_sc)
        c_sc[...] = jnp.zeros_like(c_sc)

    whh = whh_ref[...]              # (H, 3H)
    h = h_sc[...]
    c = c_sc[...]

    for j in range(TB):             # static unroll over the block
        # forward: idx = j ; backward: idx = TB-1-j.  Scalar address math only --
        # no vector loads/selects on the critical path.
        idx = j + d * (TB - 1 - 2 * j)
        g_row = g_ref[idx].astype(jnp.float32)          # (B, 3H): x-proj + bias
        gates = g_row + jnp.dot(h, whh, preferred_element_type=jnp.float32)
        # NOTE: with production H a multiple of 128 these slices are whole lane tiles.
        ingate = _sigmoid_1push(gates[:, :H])
        cellgate = jnp.tanh(gates[:, H:2 * H])
        outgate = _sigmoid_1push(gates[:, 2 * H:])
        # (1 - i)*c + i*g  ==  c + i*(g - c)   (one fewer VALU multiply)
        c = c + ingate * (cellgate - c)
        h = outgate * jnp.tanh(c)
        # Store immediately (no hs[] epilogue); dynamic idx lands the backward
        # direction's rows in forward time order, so no post-hoc flip is needed.
        out_ref[idx] = h.astype(out_ref.dtype)

    h_sc[...] = h
    c_sc[...] = c

    @pl.when(t == pl.num_programs(1) - 1)
    def _():
        hn_ref[...] = h.astype(hn_ref.dtype)
        cn_ref[...] = c.astype(cn_ref.dtype)


def _pick_time_block(T, target):
    tb = max(1, min(target, T))
    while T % tb:
        tb -= 1
    return tb


def lstm_forward(X, params, *, time_block=8, gates_dtype=jnp.float32,
                 vmem_limit_bytes=32 * 1024 * 1024):
    """X: (B, T, D) float32.  Returns (out, (hn, cn)) matching the PyTorch module:
       out: (T, B, 2H),  hn, cn: (1, B, 2H)."""
    B, T, D = X.shape
    H = params["weight_hh_f"].shape[1]
    G3 = 3 * H

    TB = _pick_time_block(T, time_block)
    n_tblocks = T // TB

    x_tm = jnp.transpose(X, (1, 0, 2))                                   # (T, B, D)

    # Fused input-projection weights: (D, 6H) = [Wih_f^T | Wih_b^T]; biases folded.
    w6 = jnp.concatenate([params["weight_ih_f"].T, params["weight_ih_b"].T], axis=1)
    b6 = jnp.concatenate([params["bias_ih_f"] + params["bias_hh_f"],
                          params["bias_ih_b"] + params["bias_hh_b"]])[None, :]   # (1, 6H)
    whh = jnp.stack([params["weight_hh_f"].T, params["weight_hh_b"].T])          # (2, H, 3H)

    # ---- Pass 1: hoisted, time-parallel input projection (one fused matmul). ----
    gates = pl.pallas_call(
        functools.partial(_gate_proj_kernel, G3),
        out_shape=jax.ShapeDtypeStruct((2, T, B, G3), gates_dtype),
        grid_spec=pltpu.PrefetchScalarGridSpec(
            num_scalar_prefetch=0,
            grid=(n_tblocks,),
            in_specs=[
                pl.BlockSpec((TB, B, D), lambda t: (t, 0, 0)),
                pl.BlockSpec((D, 2 * G3), lambda t: (0, 0)),
                pl.BlockSpec((1, 2 * G3), lambda t: (0, 0)),
            ],
            out_specs=pl.BlockSpec((2, TB, B, G3), lambda t: (0, t, 0, 0)),
        ),
        compiler_params=pltpu.CompilerParams(
            dimension_semantics=("parallel",),
            vmem_limit_bytes=vmem_limit_bytes),
    )(x_tm, w6, b6)

    # ---- Pass 2: sequential recurrence (only h @ Whh on the critical path). ----
    def _tblock(d, t):
        # d=0 -> t (forward block order); d=1 -> n_tblocks-1-t (reverse block order)
        return t + d * (n_tblocks - 1 - 2 * t)

    kernel = functools.partial(_recurrence_kernel, H, TB)

    # When lane/sublane aligned, write both directions straight into (T, B, 2H)
    # (backward half at lane offset H) -- no post-hoc concatenate.
    fuse_out = (H % 128 == 0) and (B % 8 == 0)

    if fuse_out:
        out_shapes = (
            jax.ShapeDtypeStruct((T, B, 2 * H), X.dtype),
            jax.ShapeDtypeStruct((B, 2 * H), X.dtype),
            jax.ShapeDtypeStruct((B, 2 * H), X.dtype),
        )
        out_specs = [
            pl.BlockSpec((TB, B, H), lambda d, t: (_tblock(d, t), 0, d)),
            pl.BlockSpec((B, H), lambda d, t: (0, d)),
            pl.BlockSpec((B, H), lambda d, t: (0, d)),
        ]
    else:
        out_shapes = (
            jax.ShapeDtypeStruct((2, T, B, H), X.dtype),   # per-direction outputs
            jax.ShapeDtypeStruct((2, B, H), X.dtype),      # final h per direction
            jax.ShapeDtypeStruct((2, B, H), X.dtype),      # final c per direction
        )
        out_specs = [
            pl.BlockSpec((None, TB, B, H), lambda d, t: (d, _tblock(d, t), 0, 0)),
            pl.BlockSpec((None, B, H), lambda d, t: (d, 0, 0)),
            pl.BlockSpec((None, B, H), lambda d, t: (d, 0, 0)),
        ]

    res = pl.pallas_call(
        kernel,
        out_shape=out_shapes,
        grid_spec=pltpu.PrefetchScalarGridSpec(
            num_scalar_prefetch=0,
            grid=(2, n_tblocks),
            in_specs=[
                pl.BlockSpec((None, TB, B, G3), lambda d, t: (d, _tblock(d, t), 0, 0)),
                pl.BlockSpec((None, H, G3), lambda d, t: (d, 0, 0)),
            ],
            out_specs=out_specs,
            scratch_shapes=[pltpu.VMEM((B, H), jnp.float32),
                            pltpu.VMEM((B, H), jnp.float32)],
        ),
        compiler_params=pltpu.CompilerParams(
            # direction axis is independent; time axis carries the h/c state.
            # TODO(synk): use pltpu.CORE_PARALLEL on the direction axis for v7x builds.
            dimension_semantics=("parallel", "arbitrary"),
            vmem_limit_bytes=vmem_limit_bytes),
    )(gates, whh)

    if fuse_out:
        out, hn, cn = res
        return out, (hn[None], cn[None])

    out2, hn2, cn2 = res
    out = jnp.concatenate([out2[0], out2[1]], axis=-1)                   # (T, B, 2H)
    hn = jnp.concatenate([hn2[0], hn2[1]], axis=-1)[None]                # (1, B, 2H)
    cn = jnp.concatenate([cn2[0], cn2[1]], axis=-1)[None]                # (1, B, 2H)
    return out, (hn, cn)


def _ref_lstm(X, params):
    """Pure-JAX reference mirroring the PyTorch module, for validation."""
    B, T, D = X.shape
    H = params["weight_hh_f"].shape[1]
    x_tm = jnp.transpose(X, (1, 0, 2))

    def cell(x, h, c, wih, whh, bih, bhh):
        gates = x @ wih.T + bih + h @ whh.T + bhh
        i = jax.nn.sigmoid(gates[:, :H])
        g = jnp.tanh(gates[:, H:2 * H])
        o = jax.nn.sigmoid(gates[:, 2 * H:])
        cy = (1.0 - i) * c + i * g
        hy = o * jnp.tanh(cy)
        return hy, cy

    def run(xs, wih, whh, bih, bhh):
        def step(carry, x):
            h, c = carry
            hy, cy = cell(x, h, c, wih, whh, bih, bhh)
            return (hy, cy), hy
        init = (jnp.zeros((B, H), X.dtype), jnp.zeros((B, H), X.dtype))
        (hT, cT), ys = jax.lax.scan(step, init, xs)
        return ys, hT, cT

    yf, hf, cf = run(x_tm, params["weight_ih_f"], params["weight_hh_f"],
                     params["bias_ih_f"], params["bias_hh_f"])
    yb, hb, cb = run(x_tm[::-1], params["weight_ih_b"], params["weight_hh_b"],
                     params["bias_ih_b"], params["bias_hh_b"])
    yb = yb[::-1]
    out = jnp.concatenate([yf, yb], axis=-1)
    hn = jnp.concatenate([hf, hb], axis=1)[None]
    cn = jnp.concatenate([cf, cb], axis=1)[None]
    return out, (hn, cn)


if __name__ == "__main__":
    B, T, D, H = 2, 8, 16, 32

    key = jax.random.PRNGKey(0)
    keys = jax.random.split(key, 9)
    params = {
        "weight_ih_f": jax.random.normal(keys[0], (3 * H, D), jnp.float32),
        "weight_hh_f": jax.random.normal(keys[1], (3 * H, H), jnp.float32),
        "bias_ih_f":   jax.random.normal(keys[2], (3 * H,), jnp.float32),
        "bias_hh_f":   jax.random.normal(keys[3], (3 * H,), jnp.float32),
        "weight_ih_b": jax.random.normal(keys[4], (3 * H, D), jnp.float32),
        "weight_hh_b": jax.random.normal(keys[5], (3 * H, H), jnp.float32),
        "bias_ih_b":   jax.random.normal(keys[6], (3 * H,), jnp.float32),
        "bias_hh_b":   jax.random.normal(keys[7], (3 * H,), jnp.float32),
    }
    X = jax.random.normal(keys[8], (B, T, D), jnp.float32)

    # time_block=4 -> 2 time blocks per direction, exercising the state carry
    # across grid steps as well as the in-block unrolled recurrence.
    out, (hn, cn) = lstm_forward(X, params, time_block=4)
    jax.block_until_ready((out, hn, cn))

    out_r, (hn_r, cn_r) = _ref_lstm(X, params)
    assert out.shape == (T, B, 2 * H) and hn.shape == (1, B, 2 * H) and cn.shape == (1, B, 2 * H)
    assert jnp.allclose(out, out_r, atol=1e-4, rtol=1e-4)
    assert jnp.allclose(hn, hn_r, atol=1e-4, rtol=1e-4)
    assert jnp.allclose(cn, cn_r, atol=1e-4, rtol=1e-4)

    print("KERNEL_OK")
</pallas_src>

<mosaic_0001>
module attributes {stable_mosaic.version = 11 : i64} {
  func.func @_gate_proj_kernel(%arg0: i32, %arg1: memref<4x2x16xf32, #tpu.memory_space<vmem>>, %arg2: memref<16x192xf32, #tpu.memory_space<vmem>>, %arg3: memref<1x192xf32, #tpu.memory_space<vmem>>, %arg4: memref<2x4x2x96xf32, #tpu.memory_space<vmem>>) attributes {dimension_semantics = [#tpu.dimension_semantics<parallel>], iteration_bounds = array<i64: 2>, scalar_prefetch = 0 : i64, scratch_operands = 0 : i64, tpu.core_type = #tpu.core_type<tc>, window_params = [{transform_indices = @transform_0, window_bounds = array<i64: 4, 2, 16>}, {pipeline_mode = #tpu.pipeline_mode<synchronous>, transform_indices = @transform_1, window_bounds = array<i64: 16, 192>}, {pipeline_mode = #tpu.pipeline_mode<synchronous>, transform_indices = @transform_2, window_bounds = array<i64: 1, 192>}, {transform_indices = @transform_3, window_bounds = array<i64: 2, 4, 2, 96>}]} {
    %c0 = arith.constant 0 : index
    %c0_0 = arith.constant 0 : index
    %c0_1 = arith.constant 0 : index
    %0 = vector.load %arg1[%c0, %c0_0, %c0_1] : memref<4x2x16xf32, #tpu.memory_space<vmem>>, vector<4x2x16xf32>
    %1 = vector.shape_cast %0 : vector<4x2x16xf32> to vector<8x16xf32>
    %c0_2 = arith.constant 0 : index
    %c0_3 = arith.constant 0 : index
    %2 = vector.load %arg2[%c0_2, %c0_3] : memref<16x192xf32, #tpu.memory_space<vmem>>, vector<16x192xf32>
    %cst = arith.constant dense<0.000000e+00> : vector<8x192xf32>
    %3 = tpu.matmul %1, %2, %cst {dimension_numbers = #tpu.dot_dimension_numbers<[1], [0], [0], [1], [0, 0, 1, 1], [], []>} : vector<8x16xf32>, vector<16x192xf32>, vector<8x192xf32> -> vector<8x192xf32>
    %c0_4 = arith.constant 0 : index
    %c0_5 = arith.constant 0 : index
    %4 = vector.load %arg3[%c0_4, %c0_5] : memref<1x192xf32, #tpu.memory_space<vmem>>, vector<1x192xf32>
    %5 = vector.broadcast %4 : vector<1x192xf32> to vector<8x192xf32>
    %6 = arith.addf %3, %5 : vector<8x192xf32>
    %7 = vector.extract_strided_slice %6 {offsets = [0, 0], sizes = [8, 96], strides = [1, 1]} : vector<8x192xf32> to vector<8x96xf32>
    %8 = vector.shape_cast %7 : vector<8x96xf32> to vector<4x2x96xf32>
    %c0_6 = arith.constant 0 : index
    %c0_7 = arith.constant 0 : index
    %c0_8 = arith.constant 0 : index
    %c0_9 = arith.constant 0 : index
    %9 = vector.load %arg4[%c0_6, %c0_7, %c0_8, %c0_9] : memref<2x4x2x96xf32, #tpu.memory_space<vmem>>, vector<1x4x2x96xf32>
    %10 = vector.shape_cast %9 : vector<1x4x2x96xf32> to vector<4x2x96xf32>
    %11 = vector.shape_cast %8 : vector<4x2x96xf32> to vector<1x4x2x96xf32>
    tpu.vector_store %arg4[%c0_6, %c0_7, %c0_8, %c0_9], %11 {strides = array<i32>} : memref<2x4x2x96xf32, #tpu.memory_space<vmem>>, vector<1x4x2x96xf32>,
    %12 = vector.extract_strided_slice %6 {offsets = [0, 96], sizes = [8, 96], strides = [1, 1]} : vector<8x192xf32> to vector<8x96xf32>
    %13 = vector.shape_cast %12 : vector<8x96xf32> to vector<4x2x96xf32>
    %c1 = arith.constant 1 : index
    %c0_10 = arith.constant 0 : index
    %c0_11 = arith.constant 0 : index
    %c0_12 = arith.constant 0 : index
    %14 = vector.load %arg4[%c1, %c0_10, %c0_11, %c0_12] : memref<2x4x2x96xf32, #tpu.memory_space<vmem>>, vector<1x4x2x96xf32>
    %15 = vector.shape_cast %14 : vector<1x4x2x96xf32> to vector<4x2x96xf32>
    %16 = vector.shape_cast %13 : vector<4x2x96xf32> to vector<1x4x2x96xf32>
    tpu.vector_store %arg4[%c1, %c0_10, %c0_11, %c0_12], %16 {strides = array<i32>} : memref<2x4x2x96xf32, #tpu.memory_space<vmem>>, vector<1x4x2x96xf32>,
    return
  }
  func.func @transform_0(%arg0: i32) -> (i32, i32, i32) {
    %c0_i32 = arith.constant 0 : i32
    %c0_i32_0 = arith.constant 0 : i32
    %c0_i32_1 = arith.constant 0 : i32
    return %arg0, %c0_i32, %c0_i32_0 : i32, i32, i32
  }
  func.func @transform_1(%arg0: i32) -> (i32, i32) {
    %c0_i32 = arith.constant 0 : i32
    %c0_i32_0 = arith.constant 0 : i32
    %c0_i32_1 = arith.constant 0 : i32
    return %c0_i32, %c0_i32_0 : i32, i32
  }
  func.func @transform_2(%arg0: i32) -> (i32, i32) {
    %c0_i32 = arith.constant 0 : i32
    %c0_i32_0 = arith.constant 0 : i32
    %c0_i32_1 = arith.constant 0 : i32
    return %c0_i32, %c0_i32_0 : i32, i32
  }
  func.func @transform_3(%arg0: i32) -> (i32, i32, i32, i32) {
    %c0_i32 = arith.constant 0 : i32
    %c0_i32_0 = arith.constant 0 : i32
    %c0_i32_1 = arith.constant 0 : i32
    %c0_i32_2 = arith.constant 0 : i32
    return %c0_i32, %arg0, %c0_i32_0, %c0_i32_1 : i32, i32, i32, i32
  }
}

</mosaic_0001>

<llo_original>
// kernel: tpu_custom_call.1
$region0: #{tpu_custom_call.1}
  #allocation0 [shape = 'u32[]', space=smem, size = 0x4, offset = 0x4, fixed_abs, tag = 'smem constant byte address 0x4 - core index']
  #allocation1 [shape = 'u32[72,128]{1,0:T(1,128)}', space=vmem, size = 0x9000, scoped, tag = 'internal scratch']
  #allocation9 [shape = 's32[]', space=sflag, size = 0x4, offset = 0, fixed_abs, tag = 'sflag constant byte address 0x0 - dummy sync flag']
  %s0 = inlined_call_operand.hbm [shape: f32[8,2,16], index: 0, kind: input, shape index: {}]
  %s1 = inlined_call_operand.hbm [shape: f32[16,192], index: 1, kind: input, shape index: {}]
  %s2 = inlined_call_operand.hbm [shape: f32[1,192], index: 2, kind: input, shape index: {}]
  %s3 = inlined_call_operand.hbm [shape: f32[2,8,2,96], index: 3, kind: output, shape index: {}]
  %s4 = sld [smem:[#allocation0]]
  $region57: #{tpu_custom_call.1} parent=0
    _
  %s6 = ssub.s32 1, %s4
  %s7 = scalar_select 0, %s6, %s4
  $region1: #{tpu_custom_call.1} parent=0
    #allocation2 [shape = 'u8[8192]{0}', space=vmem, size = 0x2000, scoped, tag = 'input window, operand 0']
    #allocation3 [shape = 's32[2]{0}', space=sflag, size = 0x8, scoped, tag = 'scoped memory for tpu_custom_call.1']
    #allocation4 [shape = 's32[2]{0}', space=sflag, size = 0x8, scoped, tag = 'scoped memory for tpu_custom_call.1']
    #allocation5 [shape = 'u8[16384]{0}', space=vmem, size = 0x4000, scoped, tag = 'input window, operand 1, single buffered']
    #allocation6 [shape = 's32[1]{0}', space=sflag, size = 0x4, scoped, tag = 'scoped memory for tpu_custom_call.1']
    #allocation7 [shape = 'u8[1024]{0}', space=vmem, size = 0x400, scoped, tag = 'input window, operand 2, single buffered']
    #allocation8 [shape = 'u8[16384]{0}', space=vmem, size = 0x4000, scoped, tag = 'output window, operand 0']
    %8 = vsyncpa [#allocation3], 0
    %s9 = scalar_lea.sflag [#allocation3], 1
    %10 = vsyncpa %s9, 0
    %11 = vsyncpa [#allocation6], 0
    %12 = vsyncpa [#allocation4], 0
    %s13 = scalar_lea.sflag [#allocation4], 1
    %14 = vsyncpa %s13, 0
    loop: start=0, step=1, limit=4
    $region2: #{tpu_custom_call.1} parent=1 // loop_pre_header
      _
    $region3: #{tpu_custom_call.1} parent=1 // loop_header
      %s16 = sphi 0, %s20
      %p17 = scmp.ge.s32.totalorder %s16, 4
      %s26 = sphi 0, %s28
      %s29 = sphi 0, %s26
      %s30 = sphi 0, %s29
      %s46 = sphi 0, %s30
      %s50 = sphi 0, %s50
      %s52 = sphi 0, %s50
      %s53 = sphi 0, %s52
      %s67 = sphi 0, %s53
      %s71 = sphi 0, %s71
      %s73 = sphi 0, %s71
      %s74 = sphi 0, %s73
      %s88 = sphi 0, %s74
      %s94 = sphi 0, %s96
      %s97 = sphi 0, %s94
      %s98 = sphi 0, %s97
      %s114 = sphi 0, %s98
    $region4: #{tpu_custom_call.1} parent=1 // loop_header_branch
      %19 = sbr.rel (%p17) target = $region8
    $region5: #{tpu_custom_call.1} parent=1 // loop_body
      %s21 = ssub.s32 %s16, 1
      %s22 = ssub.s32 %s16, 2
      %s23 = sadd.s32 %s16, 1
      %s24 = ssub.s32 %s16, %s23
      %p25 = scmp.eq.s32.totalorder %s24, 0
      %s27 = sadd.s32 %s26, 1
      %s28 = scalar_select %p25, %s26, %s27
      %p31 = pneg %p25
      %p32 = scmp.eq.s32.totalorder %s16, 1
      %p33 = por %p31, %p32
      %p34 = scmp.ne.s32.totalorder %s26, %s29
      %p35 = scmp.eq.s32.totalorder %s16, 0
      %p36 = por %p34, %p35
      %p37 = scmp.ne.s32.totalorder %s26, %s29
      %p38 = scmp.eq.s32.totalorder %s21, 1
      %p39 = por %p37, %p38
      %p40 = scmp.ne.s32.totalorder %s29, %s30
      %p41 = scmp.eq.s32.totalorder %s21, 0
      %p42 = por %p40, %p41
      %p43 = scmp.ne.s32.totalorder %s29, %s30
      %p44 = scmp.eq.s32.totalorder %s22, 1
      %p45 = por %p43, %p44
      %p47 = scmp.ne.s32.totalorder %s30, %s46
      %p48 = scmp.eq.s32.totalorder %s22, 0
      %p49 = por %p47, %p48
      %s51 = sadd.s32 %s50, 1
      %p54 = scmp.eq.s32.totalorder %s16, 1
      %p55 = scmp.ne.s32.totalorder %s50, %s52
      %p56 = scmp.eq.s32.totalorder %s16, 0
      %p57 = por %p55, %p56
      %p58 = scmp.ne.s32.totalorder %s50, %s52
      %p59 = scmp.eq.s32.totalorder %s21, 1
      %p60 = por %p58, %p59
      %p61 = scmp.ne.s32.totalorder %s52, %s53
      %p62 = scmp.eq.s32.totalorder %s21, 0
      %p63 = por %p61, %p62
      %p64 = scmp.ne.s32.totalorder %s52, %s53
      %p65 = scmp.eq.s32.totalorder %s22, 1
      %p66 = por %p64, %p65
      %p68 = scmp.ne.s32.totalorder %s53, %s67
      %p69 = scmp.eq.s32.totalorder %s22, 0
      %p70 = por %p68, %p69
      %s72 = sadd.s32 %s71, 1
      %p75 = scmp.eq.s32.totalorder %s16, 1
      %p76 = scmp.ne.s32.totalorder %s71, %s73
      %p77 = scmp.eq.s32.totalorder %s16, 0
      %p78 = por %p76, %p77
      %p79 = scmp.ne.s32.totalorder %s71, %s73
      %p80 = scmp.eq.s32.totalorder %s21, 1
      %p81 = por %p79, %p80
      %p82 = scmp.ne.s32.totalorder %s73, %s74
      %p83 = scmp.eq.s32.totalorder %s21, 0
      %p84 = por %p82, %p83
      %p85 = scmp.ne.s32.totalorder %s73, %s74
      %p86 = scmp.eq.s32.totalorder %s22, 1
      %p87 = por %p85, %p86
      %p89 = scmp.ne.s32.totalorder %s74, %s88
      %p90 = scmp.eq.s32.totalorder %s22, 0
      %p91 = por %p89, %p90
      %s92 = ssub.s32 %s16, %s23
      %p93 = scmp.eq.s32.totalorder %s92, 0
      %s95 = sadd.s32 %s94, 1
      %s96 = scalar_select %p93, %s94, %s95
      %p99 = pneg %p93
      %p100 = scmp.eq.s32.totalorder %s16, 1
      %p101 = por %p99, %p100
      %p102 = scmp.ne.s32.totalorder %s94, %s97
      %p103 = scmp.eq.s32.totalorder %s16, 0
      %p104 = por %p102, %p103
      %p105 = scmp.ne.s32.totalorder %s94, %s97
      %p106 = scmp.eq.s32.totalorder %s21, 1
      %p107 = por %p105, %p106
      %p108 = scmp.ne.s32.totalorder %s97, %s98
      %p109 = scmp.eq.s32.totalorder %s21, 0
      %p110 = por %p108, %p109
      %p111 = scmp.ne.s32.totalorder %s97, %s98
      %p112 = scmp.eq.s32.totalorder %s22, 1
      %p113 = por %p111, %p112
      %p115 = scmp.ne.s32.totalorder %s98, %s114
      %p116 = scmp.eq.s32.totalorder %s22, 0
      %p117 = por %p115, %p116
      %p118 = scmp.le.s32.totalorder 1, %s16
      %p119 = scmp.lt.s32.totalorder %s16, 3
      %p120 = pnand %p118, %p119
      %p121 = pneg %p120
      // Predicated region
      $region9: #{tpu_custom_call.1} parent=5 // pred_check
        _
      $region10: #{tpu_custom_call.1} parent=5 // pred_check_branch
        %123 = sbr.rel (%p120) target = $region12
      $region11: #{tpu_custom_call.1} parent=5 // pred_region
        %s124 = ssub.s32 %s16, 1
        // Predicated region
        $region13: #{tpu_custom_call.1} parent=11 // pred_check
          %p125 = pneg %p63
        $region14: #{tpu_custom_call.1} parent=11 // pred_check_branch
          %127 = sbr.rel (%p125) target = $region16
        $region15: #{tpu_custom_call.1} parent=11 // pred_region
          %129 = vsyncadd [#allocation6], 0
          %s130 = sshll.u32 %s1, 4
          %s131 = int_to_ptr.hbm [resolvable:$true] %s130
          %s132 = sshll.u32 [#allocation5], 4
          %s133 = int_to_ptr.vmem [resolvable:$true] %s132
          %138 = dma.hbm_to_vmem [thread:$0]  %s131, 512, %s133, [#allocation6], 256, 256, 16
        $region16: #{tpu_custom_call.1} parent=11 // pred_fallthru
          _
        // Predicated region
        $region17: #{tpu_custom_call.1} parent=11 // pred_check
          %p139 = pneg %p84
        $region18: #{tpu_custom_call.1} parent=11 // pred_check_branch
          %141 = sbr.rel (%p139) target = $region20
        $region19: #{tpu_custom_call.1} parent=11 // pred_region
          %143 = vsyncadd [#allocation6], 0
          %s145 = sshll.u32 %s2, 4
          %s146 = int_to_ptr.hbm [resolvable:$true] %s145
          %s147 = sshll.u32 [#allocation7], 4
          %s148 = int_to_ptr.vmem [resolvable:$true] %s147
          %150 = dma.hbm_to_vmem [thread:$0]  %s146, 32, %s148, [#allocation6]
        $region20: #{tpu_custom_call.1} parent=11 // pred_fallthru
          _
      $region12: #{tpu_custom_call.1} parent=5 // pred_fallthru
        _
      %p151 = scmp.lt.s32.totalorder %s16, 2
      // Predicated region
      $region21: #{tpu_custom_call.1} parent=5 // pred_check
        %p152 = pneg %p151
      $region22: #{tpu_custom_call.1} parent=5 // pred_check_branch
        %154 = sbr.rel (%p152) target = $region24
      $region23: #{tpu_custom_call.1} parent=5 // pred_region
        // Predicated region
        $region25: #{tpu_custom_call.1} parent=23 // pred_check
          %p155 = pneg %p36
        $region26: #{tpu_custom_call.1} parent=23 // pred_check_branch
          %157 = sbr.rel (%p155) target = $region28
        $region27: #{tpu_custom_call.1} parent=23 // pred_region
          %s158 = sand.u32 %s26, 1
          %s159 = scalar_lea.sflag [#allocation3], %s158
          %s160 = sand.u32 %s26, 1
          %s161 = smul.addr %s160, 8
          %s162 = scalar_lea.vmem [#allocation2], %s161
          %s163 = smul.u32 4, %s16
          %165 = vsyncadd %s159, 0
          %s166 = smul.addr %s163, 2
          %s167 = scalar_lea.hbm %s0, %s166
          %s168 = sshll.u32 %s167, 4
          %s169 = int_to_ptr.hbm [resolvable:$true] %s168
          %s170 = sshll.u32 %s162, 4
          %s171 = int_to_ptr.vmem [resolvable:$true] %s170
          %176 = dma.hbm_to_vmem [thread:$0]  %s169, 128, %s171, %s159, 32, 32, 2
        $region28: #{tpu_custom_call.1} parent=23 // pred_fallthru
          _
      $region24: #{tpu_custom_call.1} parent=5 // pred_fallthru
        _
      %p177 = scmp.le.s32.totalorder 1, %s16
      %p178 = scmp.lt.s32.totalorder %s16, 3
      %p179 = pnand %p177, %p178
      %p180 = pneg %p179
      // Predicated region
      $region29: #{tpu_custom_call.1} parent=5 // pred_check
        _
      $region30: #{tpu_custom_call.1} parent=5 // pred_check_branch
        %182 = sbr.rel (%p179) target = $region32
      $region31: #{tpu_custom_call.1} parent=5 // pred_region
        %s183 = ssub.s32 %s16, 1
        %s184 = sand.u32 %s29, 1
        %s185 = scalar_lea.sflag [#allocation3], %s184
        %s186 = sand.u32 %s29, 1
        %s187 = smul.addr %s186, 8
        %s188 = scalar_lea.vmem [#allocation2], %s187
        // Predicated region
        $region33: #{tpu_custom_call.1} parent=31 // pred_check
          %p189 = pneg %p42
        $region34: #{tpu_custom_call.1} parent=31 // pred_check_branch
          %191 = sbr.rel (%p189) target = $region36
        $region35: #{tpu_custom_call.1} parent=31 // pred_region
          %193 = dma.done %s185, 128
        $region36: #{tpu_custom_call.1} parent=31 // pred_fallthru
          _
        // Predicated region
        $region37: #{tpu_custom_call.1} parent=31 // pred_check
          %p194 = pneg %p63
        $region38: #{tpu_custom_call.1} parent=31 // pred_check_branch
          %196 = sbr.rel (%p194) target = $region40
        $region39: #{tpu_custom_call.1} parent=31 // pred_region
          %198 = dma.done [#allocation6], 512
        $region40: #{tpu_custom_call.1} parent=31 // pred_fallthru
          _
        // Predicated region
        $region41: #{tpu_custom_call.1} parent=31 // pred_check
          %p199 = pneg %p84
        $region42: #{tpu_custom_call.1} parent=31 // pred_check_branch
          %201 = sbr.rel (%p199) target = $region44
        $region43: #{tpu_custom_call.1} parent=31 // pred_region
          %203 = dma.done [#allocation6], 32
        $region44: #{tpu_custom_call.1} parent=31 // pred_fallthru
          _
        %s204 = sand.u32 %s29, 1
        %s205 = scalar_lea.sflag [#allocation3], %s204
        %s206 = sand.u32 %s29, 1
        %s207 = smul.addr %s206, 8
        %s208 = scalar_lea.vmem [#allocation2], %s207
        %p209 = pneg %p42
        %p210 = pneg %p39
        %p211 = pneg %p63
        %p212 = pneg %p60
        %p213 = pneg %p84
        %p214 = pneg %p81
        %p215 = pneg %p110
        %p216 = pneg %p107
        %s217 = sand.u32 %s97, 1
        %s218 = scalar_lea.sflag [#allocation4], %s217
        %s219 = sand.u32 %s97, 1
        %s220 = smul.addr %s219, 16
        %s221 = scalar_lea.vmem [#allocation8], %s220
        %s222 = smul.u32 4, %s21
        %s223 = smul.u32 4, %s21
        %v224 = vld [vmem:[%s188] sm:$0x3]
        %v225 = vld [vmem:[%s188 + $0x2] sm:$0x3]
        %v226 = vld [vmem:[%s188 + $0x4] sm:$0x3]
        %v227 = vld [vmem:[%s188 + $0x6] sm:$0x3]
        %v228 = vld [vmem:[#allocation5] sm:$0xff]
        %v229 = vld [vmem:[#allocation5 + $0x8] sm:$0xff]
        %v230 = vld [vmem:[#allocation5 + $0x10] sm:$0xff]
        %v231 = vld [vmem:[#allocation5 + $0x18] sm:$0xff]
        %v232 = vld [vmem:[#allocation7] sm:$0x3]
        %v234 = vperm.slane %v232, 0
        %v235 = vperm.slane %v232, 1
        %242 = vst [vmem:[#allocation1] ss:$4 sm:$0xff] %v224
        %s243 = scalar_lea.vmem [#allocation1], 1
        %244 = vst [vmem:[%s243] ss:$4 sm:$0xff] %v225
        %s245 = scalar_lea.vmem [#allocation1], 2
        %246 = vst [vmem:[%s245] ss:$4 sm:$0xff] %v226
        %s247 = scalar_lea.vmem [#allocation1], 3
        %248 = vst [vmem:[%s247] ss:$4 sm:$0xff] %v227
        %v249 = vld.sshfl [vmem:[#allocation1] sm:$0xff pattern:$0x73625140]
        %vm250 = vcmask 130048
        %v251 = vsel %vm250, %v249, 0
        %253 = vmatpush.msra.mxu0 0.0
        %254 = vmatpush.msra.mxu0 0.0
        %255 = vmatpush.msra.mxu0 0.0
        %256 = vmatpush.msra.mxu0 0.0
        %257 = vmatpush.msra.mxu0 0.0
        %258 = vmatpush.msra.mxu0 0.0
        %259 = vmatpush.msra.mxu0 0.0
        %260 = vmatpush.msra.mxu0 0.0
        %261 = vmatpush.msra.mxu0 0.0
        %262 = vmatpush.msra.mxu0 0.0
        %263 = vmatpush.msra.mxu0 0.0
        %264 = vmatpush.msra.mxu0 0.0
        %265 = vmatpush.msra.mxu0 0.0
        %266 = vmatpush.msra.mxu0 0.0
        %267 = vmatpush.msra.mxu0 %v230
        %268 = vmatpush.msra.mxu0 %v228
        %269 = vmatmul.f32.gmra.mxu0 %v251
        %v270 = vpop.f32.mrf.mxu0
        %v271 = vadd.f32 %v234, %v270
        %272 = vdwg.mxu0
        %273 = vmatpush.msra.mxu0 0.0
        %274 = vmatpush.msra.mxu0 0.0
        %275 = vmatpush.msra.mxu0 0.0
        %276 = vmatpush.msra.mxu0 0.0
        %277 = vmatpush.msra.mxu0 0.0
        %278 = vmatpush.msra.mxu0 0.0
        %279 = vmatpush.msra.mxu0 0.0
        %280 = vmatpush.msra.mxu0 0.0
        %281 = vmatpush.msra.mxu0 0.0
        %282 = vmatpush.msra.mxu0 0.0
        %283 = vmatpush.msra.mxu0 0.0
        %284 = vmatpush.msra.mxu0 0.0
        %285 = vmatpush.msra.mxu0 0.0
        %286 = vmatpush.msra.mxu0 0.0
        %287 = vmatpush.msra.mxu0 %v231
        %288 = vmatpush.msra.mxu0 %v229
        %289 = vmatmul.f32.gmra.mxu0 %v251
        %v290 = vpop.f32.mrf.mxu0
        %v291 = vadd.f32 %v235, %v290
        %292 = vdwg.mxu0
        %v294 = vrot.slane %v271, 2
        %v295 = vrot.slane %v271, 4
        %v296 = vrot.slane %v271, 6
        %vm300 = vcmask 779264
        %301 = vst.msk [vmem:[%s221] sm:$0x3] %vm300, %v271
        %302 = vst.msk [vmem:[%s221 + $0x2] sm:$0x3] %vm300, %v294
        %303 = vst.msk [vmem:[%s221 + $0x4] sm:$0x3] %vm300, %v295
        %304 = vst.msk [vmem:[%s221 + $0x6] sm:$0x3] %vm300, %v296
        %v306 = vrot.slane %v291, 6
        %vm307 = vcmask 1041408
        %v308 = vsel %vm307, %v271, %v306
        %vm309 = vcmask 1043458
        %v310 = vsel %vm309, %v271, %v306
        %v311 = vrot.slane %v310, 2
        %vm312 = vcmask 1045508
        %v313 = vsel %vm312, %v271, %v306
        %v314 = vrot.slane %v313, 4
        %vm315 = vcmask 1045504
        %v316 = vsel %vm315, %v306, %v271
        %v317 = vrot.slane %v316, 6
        %318 = vst [vmem:[#allocation1] ss:$4 sm:$0xff] %v308
        %v319 = vld.sshfl [vmem:[#allocation1] sm:$0xff pattern:$0x73625140]
        %v320 = vld.sshfl [vmem:[#allocation1 + $0x8] sm:$0xff pattern:$0x73625140]
        %s321 = scalar_lea.vmem [#allocation1], 32
        %322 = vst [vmem:[%s321] ss:$4 sm:$0xff] %v311
        %v323 = vld.sshfl [vmem:[#allocation1 + $0x20] sm:$0xff pattern:$0x73625140]
        %v324 = vld.sshfl [vmem:[#allocation1 + $0x28] sm:$0xff pattern:$0x73625140]
        %325 = vst [vmem:[#allocation1] ss:$4 sm:$0xff] %v314
        %v326 = vld.sshfl [vmem:[#allocation1] sm:$0xff pattern:$0x73625140]
        %v327 = vld.sshfl [vmem:[#allocation1 + $0x8] sm:$0xff pattern:$0x73625140]
        %328 = vst [vmem:[%s321] ss:$4 sm:$0xff] %v317
        %v329 = vld.sshfl [vmem:[#allocation1 + $0x20] sm:$0xff pattern:$0x73625140]
        %v330 = vld.sshfl [vmem:[#allocation1 + $0x28] sm:$0xff pattern:$0x73625140]
        %331 = vrot.lane.b32.xlu0 %v319, 32
        %v332 = vpop.permute.xlu0 %331
        %333 = vrot.lane.b32.xlu0 %v320, 32
        %v334 = vpop.permute.xlu0 %333
        %335 = vrot.lane.b32.xlu0 %v323, 32
        %v336 = vpop.permute.xlu0 %335
        %337 = vrot.lane.b32.xlu0 %v324, 32
        %v338 = vpop.permute.xlu0 %337
        %339 = vrot.lane.b32.xlu0 %v326, 32
        %v340 = vpop.permute.xlu0 %339
        %341 = vrot.lane.b32.xlu0 %v327, 32
        %v342 = vpop.permute.xlu0 %341
        %343 = vrot.lane.b32.xlu0 %v329, 32
        %v344 = vpop.permute.xlu0 %343
        %345 = vrot.lane.b32.xlu0 %v330, 32
        %v346 = vpop.permute.xlu0 %345
        %vm347 = vcmask 261120
        %v348 = vsel %vm347, %v332, %v334
        %v349 = vsel %vm347, %v336, %v338
        %v350 = vsel %vm347, %v340, %v342
        %v351 = vsel %vm347, %v344, %v346
        %s356 = scalar_lea.vmem %s221, 8 [#allocation8]
        %357 = vst.msk [vmem:[%s356] sm:$0x3] %vm300, %v348
        %358 = vst.msk [vmem:[%s356 + $0x2] sm:$0x3] %vm300, %v349
        %359 = vst.msk [vmem:[%s356 + $0x4] sm:$0x3] %vm300, %v350
        %360 = vst.msk [vmem:[%s356 + $0x6] sm:$0x3] %vm300, %v351
        %s361 = sand.u32 %s97, 1
        %s362 = scalar_lea.sflag [#allocation4], %s361
        %s363 = sand.u32 %s97, 1
        %s364 = smul.addr %s363, 16
        %s365 = scalar_lea.vmem [#allocation8], %s364
        // Predicated region
        $region45: #{tpu_custom_call.1} parent=31 // pred_check
          %p366 = pneg %p107
        $region46: #{tpu_custom_call.1} parent=31 // pred_check_branch
          %368 = sbr.rel (%p366) target = $region48
        $region47: #{tpu_custom_call.1} parent=31 // pred_region
          #allocation10 [shape = 'u32[6]{0}', space=smem, size = 0x18, scoped, tag = 'DMA stride descriptor']
          %s369 = smul.u32 4, %s21
          %371 = vsyncadd %s362, 0
          %s372 = smul.addr %s369, 2
          %s373 = scalar_lea.hbm %s3, %s372
          %s375 = sshll.u32 1, 14
          %s376 = sxor.u32 4294967295, %s375
          %s379 = sshll.u32 7, 18
          %s380 = sxor.u32 4294967295, %s379
          %s381 = sand.u32 0, %s380
          %s383 = sor.u32 %s381, 0
          %s384 = sshll.u32 %s365, 4
          %s385 = int_to_ptr.vmem [resolvable:$true] %s384
          %s386 = sshll.u32 %s373, 4
          %s387 = int_to_ptr.hbm [resolvable:$true] %s386
          %393 = sst [smem:[#allocation10]] 128
          %s394 = scalar_lea.smem [#allocation10], 1
          %395 = sst [smem:[%s394]] 256
          %s396 = scalar_lea.smem [#allocation10], 2
          %397 = sst [smem:[%s396]] 4
          %s398 = scalar_lea.smem [#allocation10], 3
          %399 = sst [smem:[%s398]] 32
          %s400 = scalar_lea.smem [#allocation10], 4
          %401 = sst [smem:[%s400]] 32
          %s402 = scalar_lea.smem [#allocation10], 5
          %403 = sst [smem:[%s402]] 2
          %405 = dma.general %s385, 256, %s387, %s362, [#allocation9], [#allocation10], %s383, 0
        $region48: #{tpu_custom_call.1} parent=31 // pred_fallthru
          _
      $region32: #{tpu_custom_call.1} parent=5 // pred_fallthru
        _
      %p406 = scmp.le.s32.totalorder 2, %s16
      // Predicated region
      $region49: #{tpu_custom_call.1} parent=5 // pred_check
        %p407 = pneg %p406
      $region50: #{tpu_custom_call.1} parent=5 // pred_check_branch
        %409 = sbr.rel (%p407) target = $region52
      $region51: #{tpu_custom_call.1} parent=5 // pred_region
        %s410 = ssub.s32 %s16, 2
        // Predicated region
        $region53: #{tpu_custom_call.1} parent=51 // pred_check
          %p411 = pneg %p113
        $region54: #{tpu_custom_call.1} parent=51 // pred_check_branch
          %413 = sbr.rel (%p411) target = $region56
        $region55: #{tpu_custom_call.1} parent=51 // pred_region
          %s414 = sand.u32 %s98, 1
          %s415 = scalar_lea.sflag [#allocation4], %s414
          %s416 = sand.u32 %s98, 1
          %s417 = smul.addr %s416, 16
          %s418 = scalar_lea.vmem [#allocation8], %s417
          %420 = dma.done %s415, 256
        $region56: #{tpu_custom_call.1} parent=51 // pred_fallthru
          _
      $region52: #{tpu_custom_call.1} parent=5 // pred_fallthru
        _
    $region6: #{tpu_custom_call.1} parent=1 // loop_footer
      %s20 = sadd.s32 1, %s16
    $region7: #{tpu_custom_call.1} parent=1 // loop_footer_branch
      %15 = sbr.rel target = $region3
    $region8: #{tpu_custom_call.1} parent=1 // loop_exit
      _
    %421 = vsyncpa [#allocation3], 1
    %s422 = scalar_lea.sflag [#allocation3], 1
    %423 = vsyncpa %s422, 1
    %424 = vsyncpa [#allocation6], 1
    %425 = vsyncpa [#allocation4], 1
    %s426 = scalar_lea.sflag [#allocation4], 1
    %427 = vsyncpa %s426, 1

</llo_original>
